<compile_context>
chip_gen: v5e
topology: v5e:2x2
jax: 0.10.0
libtpu: 0.0.40
codegen_flags: <defaults>
</compile_context>

<pallas_src>
import functools

import jax
import jax.numpy as jnp
from jax.experimental import pallas as pl
from jax.experimental.pallas import tpu as pltpu

EPS = 1e-5      # torch.nn.LayerNorm default eps
LANE = 128      # TPU lane width


def _round_up(n, m):
    return ((n + m - 1) // m) * m


def _layernorm(h, gamma, beta, true_dim, mask=None):
    """LayerNorm over the last axis of f32 `h` using `true_dim` elements.

    If `h` is lane-padded past `true_dim`, the padded lanes must be zero on
    entry and `mask` (1.0 on real lanes, 0.0 on padded) must be supplied;
    gamma/beta are zero-padded there so padded lanes stay zero on exit.
    """
    inv_n = jnp.float32(1.0 / true_dim)
    mu = jnp.sum(h, axis=-1, keepdims=True) * inv_n
    c = h - mu
    if mask is not None:
        c = c * mask          # one broadcast vmul instead of iota+cmp+select
    var = jnp.sum(c * c, axis=-1, keepdims=True) * inv_n
    return c * jax.lax.rsqrt(var + EPS) * gamma + beta


def feature_refiner_kernel(x_ref, w1_ref, w2_ref, w3_ref, vec_ref, o_ref,
                           *, hidden, needs_mask, compute_dtype):
    # vec_ref packs all (1, Hp) vectors into one (8, Hp) replicated operand:
    #   0: b1, 1: g1, 2: be1, 3: b2, 4: b3, 5: g2, 6: be2, 7: lane mask
    vec = vec_ref[...]
    b1, g1, be1 = vec[0:1], vec[1:2], vec[2:3]
    b2, b3 = vec[3:4], vec[4:5]
    g2, be2 = vec[5:6], vec[6:7]
    mask = vec[7:8] if needs_mask else None

    # Matmuls in bf16 (MXU-native) with f32 accumulation; LayerNorm / bias /
    # ReLU math stays f32.
    x = x_ref[...].astype(compute_dtype)

    h = jnp.dot(x, w1_ref[...], preferred_element_type=jnp.float32) + b1
    h = _layernorm(h, g1, be1, hidden, mask)

    h = jnp.dot(h.astype(compute_dtype), w2_ref[...],
                preferred_element_type=jnp.float32) + b2
    h = jnp.maximum(h, 0.0)                                      # ReLU

    h = jnp.dot(h.astype(compute_dtype), w3_ref[...],
                preferred_element_type=jnp.float32) + b3
    h = _layernorm(h, g2, be2, hidden, mask)

    if h.shape[-1] != o_ref.shape[-1]:        # drop padded lanes (static slice)
        h = h[:, :o_ref.shape[-1]]
    o_ref[...] = h.astype(o_ref.dtype)


def _vmem_budget_bytes():
    """~80% of this chip's physical VMEM (headroom for Mosaic scratch/sems)."""
    try:  # heuristic query only -- never wraps the real pallas_call
        cap = int(pltpu.get_tpu_info().vmem_capacity_bytes)
    except Exception:
        cap = 64 * 2**20                      # conservative (v7x-sized)
    return (cap * 13) // 16                   # ~52 MiB @64 MiB, ~104 MiB @128 MiB


def feature_refiner(x, params, *, tile_rows=None, compute_dtype=jnp.bfloat16,
                    vmem_budget_bytes=None):
    """Fused FeatureRefiner forward. x: (B, in_features) -> (B, hidden).

    Note: supplying bf16 activations (x) halves activation HBM traffic and is
    recommended when the surrounding model tolerates it (the kernel is
    activation-bandwidth bound for small `hidden`).
    """
    B, in_features = x.shape
    hidden = params["g1"].shape[-1]

    act_dtype = x.dtype
    act_bytes = jnp.dtype(act_dtype).itemsize
    w_bytes = jnp.dtype(compute_dtype).itemsize
    sublane = 16 if act_bytes == 2 else 8

    Hp = _round_up(hidden, LANE)     # lane-dense padded hidden width
    needs_mask = (Hp != hidden)
    Fw = _round_up(in_features, 8)   # w1 sublane-padded rows (VMEM layout)

    if vmem_budget_bytes is None:
        vmem_budget_bytes = _vmem_budget_bytes()

    def footprint(tr):
        """Per-step VMEM bytes: double-buffered tiles, replicated params
        (default double-buffered), and live f32 intermediates."""
        acts = 2 * tr * (in_features + hidden) * act_bytes
        inter = 3 * tr * Hp * 4
        weights = 2 * (Fw * Hp + 2 * Hp * Hp) * w_bytes
        vecs = 2 * 8 * Hp * 4
        return acts + inter + weights + vecs

    if tile_rows is None:
        if B <= sublane:
            tile_rows = sublane
        else:
            # >= 2 grid steps so ("parallel",) shards across both v7x
            # TensorCores and the pipeline has something to overlap; cap at
            # 512 rows (~85% of HBM roofline measured; 4-8 steps at large B).
            tile_rows = min(512, _round_up(pl.cdiv(B, 2), sublane))
        # Shrink to the VMEM budget, but keep M >= 128 (MXU fill) if possible.
        floor = min(tile_rows, max(sublane, 128))
        while tile_rows > floor and footprint(tile_rows) > vmem_budget_bytes:
            tile_rows = max(floor, _round_up(tile_rows // 2, sublane))
        if footprint(tile_rows) > vmem_budget_bytes:
            # TODO(synk): weight-streaming path (K-blocked 'arbitrary' grid axis
            # with an f32 accumulator) instead of collapsing M when the resident
            # weights alone exceed the VMEM budget.
            while tile_rows > sublane and footprint(tile_rows) > vmem_budget_bytes:
                tile_rows = max(sublane, _round_up(tile_rows // 2, sublane))
    if tile_rows % sublane != 0:
        raise ValueError(f"tile_rows must be a multiple of {sublane}")

    # Ragged grid: last tile's out-of-bounds rows are garbage on read (rows are
    # independent throughout) and masked on write -- no wrapper pad/slice copy.
    grid = (pl.cdiv(B, tile_rows),)

    # --- parameters: bf16 weights lane-padded to Hp; vectors packed (8, Hp) ---
    def pad_w(w, rows, cols):
        w = jnp.asarray(w).reshape((-1, w.shape[-1])).astype(compute_dtype)
        pr, pc = rows - w.shape[0], cols - w.shape[1]
        return jnp.pad(w, ((0, pr), (0, pc))) if (pr or pc) else w

    w1_p = pad_w(params["w1"], in_features, Hp)
    w2_p = pad_w(params["w2"], Hp, Hp)
    w3_p = pad_w(params["w3"], Hp, Hp)

    def vrow(v):
        v = jnp.asarray(v, jnp.float32).reshape(-1)
        return jnp.pad(v, (0, Hp - v.shape[0]))

    lane_mask = (jnp.arange(Hp) < hidden).astype(jnp.float32)
    vec = jnp.stack([vrow(params["b1"]), vrow(params["g1"]), vrow(params["be1"]),
                     vrow(params["b2"]), vrow(params["b3"]),
                     vrow(params["g2"]), vrow(params["be2"]), lane_mask])

    flops = 2 * B * (in_features * hidden + 2 * hidden * hidden)
    bytes_accessed = (B * (in_features + hidden) * act_bytes
                      + (Fw * Hp + 2 * Hp * Hp) * w_bytes
                      + 8 * Hp * 4)
    cost = pl.CostEstimate(flops=flops, transcendentals=0,
                           bytes_accessed=bytes_accessed)

    # Scoped VMEM: our footprint + 25% headroom, never above the budgeted
    # fraction of physical VMEM (leaves room for Mosaic internal scratch).
    vmem_limit = int(min(vmem_budget_bytes,
                         max(32 * 2**20, (footprint(tile_rows) * 5) // 4)))

    out = pl.pallas_call(
        functools.partial(feature_refiner_kernel, hidden=hidden,
                          needs_mask=needs_mask, compute_dtype=compute_dtype),
        out_shape=jax.ShapeDtypeStruct((B, hidden), act_dtype),
        grid_spec=pltpu.PrefetchScalarGridSpec(
            num_scalar_prefetch=0,
            grid=grid,
            in_specs=[
                pl.BlockSpec((tile_rows, in_features), lambda i: (i, 0)),  # x
                pl.BlockSpec((in_features, Hp), lambda i: (0, 0)),         # w1
                pl.BlockSpec((Hp, Hp), lambda i: (0, 0)),                  # w2
                pl.BlockSpec((Hp, Hp), lambda i: (0, 0)),                  # w3
                pl.BlockSpec((8, Hp), lambda i: (0, 0)),                   # packed vectors
            ],
            out_specs=pl.BlockSpec((tile_rows, hidden), lambda i: (i, 0)),
        ),
        compiler_params=pltpu.CompilerParams(
            dimension_semantics=("parallel",),
            vmem_limit_bytes=vmem_limit,
        ),
        cost_estimate=cost,
    )(x, w1_p, w2_p, w3_p, vec)
    return out


def init_params(key, in_features, hidden_dim):
    """PyTorch nn.Linear / nn.LayerNorm default init. Weights are stored f32
    (fan_in, fan_out); the wrapper casts matmul inputs to bf16 (MXU-native)
    unless compute_dtype=jnp.float32 is requested."""
    ks = jax.random.split(key, 3)

    def lin(k, fan_in, fan_out):
        bound = float(fan_in) ** -0.5
        kw, kb = jax.random.split(k)
        w = jax.random.uniform(kw, (fan_in, fan_out), jnp.float32, -bound, bound)
        b = jax.random.uniform(kb, (1, fan_out), jnp.float32, -bound, bound)
        return w, b

    w1, b1 = lin(ks[0], in_features, hidden_dim)
    w2, b2 = lin(ks[1], hidden_dim, hidden_dim)
    w3, b3 = lin(ks[2], hidden_dim, hidden_dim)
    return dict(
        w1=w1, b1=b1,
        g1=jnp.ones((1, hidden_dim), jnp.float32),
        be1=jnp.zeros((1, hidden_dim), jnp.float32),
        w2=w2, b2=b2,
        w3=w3, b3=b3,
        g2=jnp.ones((1, hidden_dim), jnp.float32),
        be2=jnp.zeros((1, hidden_dim), jnp.float32),
    )


def feature_refiner_ref(x, p, compute_dtype=jnp.bfloat16):
    """Pure-JAX reference of the PyTorch forward pass, same mixed precision."""
    def mm(a, w):
        return jnp.dot(a.astype(compute_dtype), w.astype(compute_dtype),
                       preferred_element_type=jnp.float32)

    h = mm(x, p["w1"]) + p["b1"]
    h = _layernorm(h, p["g1"], p["be1"], h.shape[-1])
    h = mm(h, p["w2"]) + p["b2"]
    h = jnp.maximum(h, 0.0)
    h = mm(h, p["w3"]) + p["b3"]
    h = _layernorm(h, p["g2"], p["be2"], h.shape[-1])
    return h


if __name__ == "__main__":
    in_features = 32
    hidden_dim = 64
    batch = 8

    key = jax.random.PRNGKey(0)
    kx, kx2, kp = jax.random.split(key, 3)
    params = init_params(kp, in_features, hidden_dim)

    # Small single-tile case.
    x = jax.random.normal(kx, (batch, in_features), jnp.float32)
    out = jax.block_until_ready(feature_refiner(x, params))
    ref = feature_refiner_ref(x, params)
    assert out.shape == (batch, hidden_dim)
    assert jnp.allclose(out, ref, atol=2e-3, rtol=2e-3), (
        f"mismatch vs reference: {jnp.max(jnp.abs(out - ref))}")

    # Ragged multi-step grid: B=40, tile_rows=16 -> grid=(3,), masked last tile.
    x2 = jax.random.normal(kx2, (40, in_features), jnp.float32)
    out2 = jax.block_until_ready(feature_refiner(x2, params, tile_rows=16))
    ref2 = feature_refiner_ref(x2, params)
    assert out2.shape == (40, hidden_dim)
    assert jnp.allclose(out2, ref2, atol=2e-3, rtol=2e-3), (
        f"mismatch vs reference (tiled): {jnp.max(jnp.abs(out2 - ref2))}")

    print("KERNEL_OK")
</pallas_src>

<mosaic_0001>
module attributes {stable_mosaic.version = 11 : i64} {
  func.func @feature_refiner_kernel(%arg0: i32, %arg1: memref<8x32xf32, #tpu.memory_space<vmem>>, %arg2: memref<32x128xbf16, #tpu.memory_space<vmem>>, %arg3: memref<128x128xbf16, #tpu.memory_space<vmem>>, %arg4: memref<128x128xbf16, #tpu.memory_space<vmem>>, %arg5: memref<8x128xf32, #tpu.memory_space<vmem>>, %arg6: memref<8x64xf32, #tpu.memory_space<vmem>>) attributes {dimension_semantics = [#tpu.dimension_semantics<parallel>], iteration_bounds = array<i64: 1>, scalar_prefetch = 0 : i64, scratch_operands = 0 : i64, tpu.core_type = #tpu.core_type<tc>, window_params = [{transform_indices = @transform_0, window_bounds = array<i64: 8, 32>}, {pipeline_mode = #tpu.pipeline_mode<synchronous>, transform_indices = @transform_1, window_bounds = array<i64: 32, 128>}, {pipeline_mode = #tpu.pipeline_mode<synchronous>, transform_indices = @transform_2, window_bounds = array<i64: 128, 128>}, {pipeline_mode = #tpu.pipeline_mode<synchronous>, transform_indices = @transform_3, window_bounds = array<i64: 128, 128>}, {pipeline_mode = #tpu.pipeline_mode<synchronous>, transform_indices = @transform_4, window_bounds = array<i64: 8, 128>}, {transform_indices = @transform_5, window_bounds = array<i64: 8, 64>}]} {
    %c0 = arith.constant 0 : index
    %c0_0 = arith.constant 0 : index
    %0 = vector.load %arg5[%c0, %c0_0] : memref<8x128xf32, #tpu.memory_space<vmem>>, vector<8x128xf32>
    %1 = vector.extract_strided_slice %0 {offsets = [0, 0], sizes = [1, 128], strides = [1, 1]} : vector<8x128xf32> to vector<1x128xf32>
    %2 = vector.extract_strided_slice %0 {offsets = [1, 0], sizes = [1, 128], strides = [1, 1]} : vector<8x128xf32> to vector<1x128xf32>
    %3 = vector.extract_strided_slice %0 {offsets = [2, 0], sizes = [1, 128], strides = [1, 1]} : vector<8x128xf32> to vector<1x128xf32>
    %4 = vector.extract_strided_slice %0 {offsets = [3, 0], sizes = [1, 128], strides = [1, 1]} : vector<8x128xf32> to vector<1x128xf32>
    %5 = vector.extract_strided_slice %0 {offsets = [4, 0], sizes = [1, 128], strides = [1, 1]} : vector<8x128xf32> to vector<1x128xf32>
    %6 = vector.extract_strided_slice %0 {offsets = [5, 0], sizes = [1, 128], strides = [1, 1]} : vector<8x128xf32> to vector<1x128xf32>
    %7 = vector.extract_strided_slice %0 {offsets = [6, 0], sizes = [1, 128], strides = [1, 1]} : vector<8x128xf32> to vector<1x128xf32>
    %8 = vector.extract_strided_slice %0 {offsets = [7, 0], sizes = [1, 128], strides = [1, 1]} : vector<8x128xf32> to vector<1x128xf32>
    %c0_1 = arith.constant 0 : index
    %c0_2 = arith.constant 0 : index
    %9 = vector.load %arg1[%c0_1, %c0_2] : memref<8x32xf32, #tpu.memory_space<vmem>>, vector<8x32xf32>
    %10 = arith.truncf %9 : vector<8x32xf32> to vector<8x32xbf16>
    %c0_3 = arith.constant 0 : index
    %c0_4 = arith.constant 0 : index
    %11 = vector.load %arg2[%c0_3, %c0_4] : memref<32x128xbf16, #tpu.memory_space<vmem>>, vector<32x128xbf16>
    %cst = arith.constant dense<0.000000e+00> : vector<8x128xf32>
    %12 = tpu.matmul %10, %11, %cst {dimension_numbers = #tpu.dot_dimension_numbers<[1], [0], [0], [1], [0, 0, 1, 1], [], []>} : vector<8x32xbf16>, vector<32x128xbf16>, vector<8x128xf32> -> vector<8x128xf32>
    %13 = vector.broadcast %1 : vector<1x128xf32> to vector<8x128xf32>
    %14 = arith.addf %12, %13 : vector<8x128xf32>
    %cst_5 = arith.constant dense<0.000000e+00> : vector<8xf32>
    %15 = vector.multi_reduction <add>, %14, %cst_5 [1] : vector<8x128xf32> to vector<8xf32>
    %16 = vector.shape_cast %15 : vector<8xf32> to vector<8x1xf32>
    %cst_6 = arith.constant 1.562500e-02 : f32
    %17 = vector.broadcast %cst_6 : f32 to vector<8x1xf32>
    %18 = arith.mulf %16, %17 : vector<8x1xf32>
    %19 = vector.broadcast %18 : vector<8x1xf32> to vector<8x128xf32>
    %20 = arith.subf %14, %19 : vector<8x128xf32>
    %21 = vector.broadcast %8 : vector<1x128xf32> to vector<8x128xf32>
    %22 = arith.mulf %20, %21 : vector<8x128xf32>
    %23 = arith.mulf %22, %22 : vector<8x128xf32>
    %cst_7 = arith.constant dense<0.000000e+00> : vector<8xf32>
    %24 = vector.multi_reduction <add>, %23, %cst_7 [1] : vector<8x128xf32> to vector<8xf32>
    %25 = vector.shape_cast %24 : vector<8xf32> to vector<8x1xf32>
    %cst_8 = arith.constant 1.562500e-02 : f32
    %26 = vector.broadcast %cst_8 : f32 to vector<8x1xf32>
    %27 = arith.mulf %25, %26 : vector<8x1xf32>
    %cst_9 = arith.constant 9.99999974E-6 : f32
    %28 = vector.broadcast %cst_9 : f32 to vector<8x1xf32>
    %29 = arith.addf %27, %28 : vector<8x1xf32>
    %30 = math.rsqrt %29 : vector<8x1xf32>
    %31 = vector.broadcast %30 : vector<8x1xf32> to vector<8x128xf32>
    %32 = arith.mulf %22, %31 : vector<8x128xf32>
    %33 = vector.broadcast %2 : vector<1x128xf32> to vector<8x128xf32>
    %34 = arith.mulf %32, %33 : vector<8x128xf32>
    %35 = vector.broadcast %3 : vector<1x128xf32> to vector<8x128xf32>
    %36 = arith.addf %34, %35 : vector<8x128xf32>
    %37 = arith.truncf %36 : vector<8x128xf32> to vector<8x128xbf16>
    %c0_10 = arith.constant 0 : index
    %c0_11 = arith.constant 0 : index
    %38 = vector.load %arg3[%c0_10, %c0_11] : memref<128x128xbf16, #tpu.memory_space<vmem>>, vector<128x128xbf16>
    %cst_12 = arith.constant dense<0.000000e+00> : vector<8x128xf32>
    %39 = tpu.matmul %37, %38, %cst_12 {dimension_numbers = #tpu.dot_dimension_numbers<[1], [0], [0], [1], [0, 0, 1, 1], [], []>} : vector<8x128xbf16>, vector<128x128xbf16>, vector<8x128xf32> -> vector<8x128xf32>
    %40 = vector.broadcast %4 : vector<1x128xf32> to vector<8x128xf32>
    %41 = arith.addf %39, %40 : vector<8x128xf32>
    %cst_13 = arith.constant 0.000000e+00 : f32
    %42 = vector.broadcast %cst_13 : f32 to vector<8x128xf32>
    %43 = arith.maximumf %41, %42 : vector<8x128xf32>
    %44 = arith.truncf %43 : vector<8x128xf32> to vector<8x128xbf16>
    %c0_14 = arith.constant 0 : index
    %c0_15 = arith.constant 0 : index
    %45 = vector.load %arg4[%c0_14, %c0_15] : memref<128x128xbf16, #tpu.memory_space<vmem>>, vector<128x128xbf16>
    %cst_16 = arith.constant dense<0.000000e+00> : vector<8x128xf32>
    %46 = tpu.matmul %44, %45, %cst_16 {dimension_numbers = #tpu.dot_dimension_numbers<[1], [0], [0], [1], [0, 0, 1, 1], [], []>} : vector<8x128xbf16>, vector<128x128xbf16>, vector<8x128xf32> -> vector<8x128xf32>
    %47 = vector.broadcast %5 : vector<1x128xf32> to vector<8x128xf32>
    %48 = arith.addf %46, %47 : vector<8x128xf32>
    %cst_17 = arith.constant dense<0.000000e+00> : vector<8xf32>
    %49 = vector.multi_reduction <add>, %48, %cst_17 [1] : vector<8x128xf32> to vector<8xf32>
    %50 = vector.shape_cast %49 : vector<8xf32> to vector<8x1xf32>
    %cst_18 = arith.constant 1.562500e-02 : f32
    %51 = vector.broadcast %cst_18 : f32 to vector<8x1xf32>
    %52 = arith.mulf %50, %51 : vector<8x1xf32>
    %53 = vector.broadcast %52 : vector<8x1xf32> to vector<8x128xf32>
    %54 = arith.subf %48, %53 : vector<8x128xf32>
    %55 = vector.broadcast %8 : vector<1x128xf32> to vector<8x128xf32>
    %56 = arith.mulf %54, %55 : vector<8x128xf32>
    %57 = arith.mulf %56, %56 : vector<8x128xf32>
    %cst_19 = arith.constant dense<0.000000e+00> : vector<8xf32>
    %58 = vector.multi_reduction <add>, %57, %cst_19 [1] : vector<8x128xf32> to vector<8xf32>
    %59 = vector.shape_cast %58 : vector<8xf32> to vector<8x1xf32>
    %cst_20 = arith.constant 1.562500e-02 : f32
    %60 = vector.broadcast %cst_20 : f32 to vector<8x1xf32>
    %61 = arith.mulf %59, %60 : vector<8x1xf32>
    %cst_21 = arith.constant 9.99999974E-6 : f32
    %62 = vector.broadcast %cst_21 : f32 to vector<8x1xf32>
    %63 = arith.addf %61, %62 : vector<8x1xf32>
    %64 = math.rsqrt %63 : vector<8x1xf32>
    %65 = vector.broadcast %64 : vector<8x1xf32> to vector<8x128xf32>
    %66 = arith.mulf %56, %65 : vector<8x128xf32>
    %67 = vector.broadcast %6 : vector<1x128xf32> to vector<8x128xf32>
    %68 = arith.mulf %66, %67 : vector<8x128xf32>
    %69 = vector.broadcast %7 : vector<1x128xf32> to vector<8x128xf32>
    %70 = arith.addf %68, %69 : vector<8x128xf32>
    %71 = vector.extract_strided_slice %70 {offsets = [0, 0], sizes = [8, 64], strides = [1, 1]} : vector<8x128xf32> to vector<8x64xf32>
    %c0_22 = arith.constant 0 : index
    %c0_23 = arith.constant 0 : index
    %72 = vector.load %arg6[%c0_22, %c0_23] : memref<8x64xf32, #tpu.memory_space<vmem>>, vector<8x64xf32>
    tpu.vector_store %arg6[%c0_22, %c0_23], %71 {strides = array<i32>} : memref<8x64xf32, #tpu.memory_space<vmem>>, vector<8x64xf32>,
    return
  }
  func.func @transform_0(%arg0: i32) -> (i32, i32) {
    %c0_i32 = arith.constant 0 : i32
    %c0_i32_0 = arith.constant 0 : i32
    return %arg0, %c0_i32 : i32, i32
  }
  func.func @transform_1(%arg0: i32) -> (i32, i32) {
    %c0_i32 = arith.constant 0 : i32
    %c0_i32_0 = arith.constant 0 : i32
    %c0_i32_1 = arith.constant 0 : i32
    return %c0_i32, %c0_i32_0 : i32, i32
  }
  func.func @transform_2(%arg0: i32) -> (i32, i32) {
    %c0_i32 = arith.constant 0 : i32
    %c0_i32_0 = arith.constant 0 : i32
    %c0_i32_1 = arith.constant 0 : i32
    return %c0_i32, %c0_i32_0 : i32, i32
  }
  func.func @transform_3(%arg0: i32) -> (i32, i32) {
    %c0_i32 = arith.constant 0 : i32
    %c0_i32_0 = arith.constant 0 : i32
    %c0_i32_1 = arith.constant 0 : i32
    return %c0_i32, %c0_i32_0 : i32, i32
  }
  func.func @transform_4(%arg0: i32) -> (i32, i32) {
    %c0_i32 = arith.constant 0 : i32
    %c0_i32_0 = arith.constant 0 : i32
    %c0_i32_1 = arith.constant 0 : i32
    return %c0_i32, %c0_i32_0 : i32, i32
  }
  func.func @transform_5(%arg0: i32) -> (i32, i32) {
    %c0_i32 = arith.constant 0 : i32
    %c0_i32_0 = arith.constant 0 : i32
    return %arg0, %c0_i32 : i32, i32
  }
}

</mosaic_0001>

<llo_original>
// kernel: tpu_custom_call.1
$region0: #{tpu_custom_call.1}
  #allocation0 [shape = 'u32[]', space=smem, size = 0x4, offset = 0x4, fixed_abs, tag = 'smem constant byte address 0x4 - core index']
  #allocation1 [shape = 'u32[72,128]{1,0:T(1,128)}', space=vmem, size = 0x9000, scoped, tag = 'internal scratch']
  %s0 = inlined_call_operand.hbm [shape: f32[8,32], index: 0, kind: input, shape index: {}]
  %s1 = inlined_call_operand.hbm [shape: bf16[32,128], index: 1, kind: input, shape index: {}]
  %s2 = inlined_call_operand.hbm [shape: bf16[128,128], index: 2, kind: input, shape index: {}]
  %s3 = inlined_call_operand.hbm [shape: bf16[128,128], index: 3, kind: input, shape index: {}]
  %s4 = inlined_call_operand.hbm [shape: f32[8,128], index: 4, kind: input, shape index: {}]
  %s5 = inlined_call_operand.hbm [shape: f32[8,64], index: 5, kind: output, shape index: {}]
  %s6 = sld [smem:[#allocation0]]
  $region50: #{tpu_custom_call.1} parent=0
    _
  %s8 = ssub.s32 1, %s6
  %s9 = scalar_select 0, %s8, %s6
  $region1: #{tpu_custom_call.1} parent=0
    #allocation2 [shape = 'u8[4096]{0}', space=vmem, size = 0x1000, scoped, tag = 'input window, operand 0, single buffered']
    #allocation3 [shape = 's32[1]{0}', space=sflag, size = 0x4, scoped, tag = 'scoped memory for tpu_custom_call.1']
    #allocation4 [shape = 's32[1]{0}', space=sflag, size = 0x4, scoped, tag = 'scoped memory for tpu_custom_call.1']
    #allocation5 [shape = 'u8[8192]{0}', space=vmem, size = 0x2000, scoped, tag = 'input window, operand 1, single buffered']
    #allocation6 [shape = 's32[1]{0}', space=sflag, size = 0x4, scoped, tag = 'scoped memory for tpu_custom_call.1']
    #allocation7 [shape = 'u8[32768]{0}', space=vmem, size = 0x8000, scoped, tag = 'input window, operand 2, single buffered']
    #allocation8 [shape = 'u8[32768]{0}', space=vmem, size = 0x8000, scoped, tag = 'input window, operand 3, single buffered']
    #allocation9 [shape = 's32[1]{0}', space=sflag, size = 0x4, scoped, tag = 'scoped memory for tpu_custom_call.1']
    #allocation10 [shape = 'u8[4096]{0}', space=vmem, size = 0x1000, scoped, tag = 'input window, operand 4, single buffered']
    #allocation11 [shape = 'u8[4096]{0}', space=vmem, size = 0x1000, scoped, tag = 'output window, operand 0, single buffered']
    %10 = vsyncpa [#allocation3], 0
    %11 = vsyncpa [#allocation6], 0
    %12 = vsyncpa [#allocation9], 0
    %13 = vsyncpa [#allocation4], 0
    // Predicated region
    $region2: #{tpu_custom_call.1} parent=1 // pred_check
      _
    $region3: #{tpu_custom_call.1} parent=1 // pred_check_branch
      %15 = sbr.rel (0) target = $region5
    $region4: #{tpu_custom_call.1} parent=1 // pred_region
      %17 = vsyncadd [#allocation3], 0
      %s19 = sshll.u32 %s0, 4
      %s20 = int_to_ptr.hbm [resolvable:$true] %s19
      %s21 = sshll.u32 [#allocation2], 4
      %s22 = int_to_ptr.vmem [resolvable:$true] %s21
      %24 = dma.hbm_to_vmem [thread:$0]  %s20, 128, %s22, [#allocation3]
    $region5: #{tpu_custom_call.1} parent=1 // pred_fallthru
      _
    // Predicated region
    $region6: #{tpu_custom_call.1} parent=1 // pred_check
      _
    $region7: #{tpu_custom_call.1} parent=1 // pred_check_branch
      %26 = sbr.rel (0) target = $region9
    $region8: #{tpu_custom_call.1} parent=1 // pred_region
      %28 = vsyncadd [#allocation6], 0
      %s29 = sshll.u32 %s1, 4
      %s30 = int_to_ptr.hbm [resolvable:$true] %s29
      %s31 = sshll.u32 [#allocation5], 4
      %s32 = int_to_ptr.vmem [resolvable:$true] %s31
      %37 = dma.hbm_to_vmem [thread:$0]  %s30, 256, %s32, [#allocation6], 64, 64, 4
    $region9: #{tpu_custom_call.1} parent=1 // pred_fallthru
      _
    // Predicated region
    $region10: #{tpu_custom_call.1} parent=1 // pred_check
      _
    $region11: #{tpu_custom_call.1} parent=1 // pred_check_branch
      %39 = sbr.rel (0) target = $region13
    $region12: #{tpu_custom_call.1} parent=1 // pred_region
      %41 = vsyncadd [#allocation6], 0
      %s42 = sshll.u32 %s2, 4
      %s43 = int_to_ptr.hbm [resolvable:$true] %s42
      %s44 = sshll.u32 [#allocation7], 4
      %s45 = int_to_ptr.vmem [resolvable:$true] %s44
      %50 = dma.hbm_to_vmem [thread:$0]  %s43, 1024, %s45, [#allocation6], 64, 64, 4
    $region13: #{tpu_custom_call.1} parent=1 // pred_fallthru
      _
    // Predicated region
    $region14: #{tpu_custom_call.1} parent=1 // pred_check
      _
    $region15: #{tpu_custom_call.1} parent=1 // pred_check_branch
      %52 = sbr.rel (0) target = $region17
    $region16: #{tpu_custom_call.1} parent=1 // pred_region
      %54 = vsyncadd [#allocation9], 0
      %s55 = sshll.u32 %s3, 4
      %s56 = int_to_ptr.hbm [resolvable:$true] %s55
      %s57 = sshll.u32 [#allocation8], 4
      %s58 = int_to_ptr.vmem [resolvable:$true] %s57
      %63 = dma.hbm_to_vmem [thread:$0]  %s56, 1024, %s58, [#allocation9], 64, 64, 4
    $region17: #{tpu_custom_call.1} parent=1 // pred_fallthru
      _
    // Predicated region
    $region18: #{tpu_custom_call.1} parent=1 // pred_check
      _
    $region19: #{tpu_custom_call.1} parent=1 // pred_check_branch
      %65 = sbr.rel (0) target = $region21
    $region20: #{tpu_custom_call.1} parent=1 // pred_region
      %67 = vsyncadd [#allocation9], 0
      %s69 = sshll.u32 %s4, 4
      %s70 = int_to_ptr.hbm [resolvable:$true] %s69
      %s71 = sshll.u32 [#allocation10], 4
      %s72 = int_to_ptr.vmem [resolvable:$true] %s71
      %74 = dma.hbm_to_vmem [thread:$0]  %s70, 128, %s72, [#allocation9]
    $region21: #{tpu_custom_call.1} parent=1 // pred_fallthru
      _
    // Predicated region
    $region22: #{tpu_custom_call.1} parent=1 // pred_check
      _
    $region23: #{tpu_custom_call.1} parent=1 // pred_check_branch
      %76 = sbr.rel (0) target = $region25
    $region24: #{tpu_custom_call.1} parent=1 // pred_region
      %78 = dma.done [#allocation3], 128
    $region25: #{tpu_custom_call.1} parent=1 // pred_fallthru
      _
    // Predicated region
    $region26: #{tpu_custom_call.1} parent=1 // pred_check
      _
    $region27: #{tpu_custom_call.1} parent=1 // pred_check_branch
      %80 = sbr.rel (0) target = $region29
    $region28: #{tpu_custom_call.1} parent=1 // pred_region
      %82 = dma.done [#allocation6], 256
    $region29: #{tpu_custom_call.1} parent=1 // pred_fallthru
      _
    // Predicated region
    $region30: #{tpu_custom_call.1} parent=1 // pred_check
      _
    $region31: #{tpu_custom_call.1} parent=1 // pred_check_branch
      %84 = sbr.rel (0) target = $region33
    $region32: #{tpu_custom_call.1} parent=1 // pred_region
      %86 = dma.done [#allocation6], 1024
    $region33: #{tpu_custom_call.1} parent=1 // pred_fallthru
      _
    // Predicated region
    $region34: #{tpu_custom_call.1} parent=1 // pred_check
      _
    $region35: #{tpu_custom_call.1} parent=1 // pred_check_branch
      %88 = sbr.rel (0) target = $region37
    $region36: #{tpu_custom_call.1} parent=1 // pred_region
      %90 = dma.done [#allocation9], 1024
    $region37: #{tpu_custom_call.1} parent=1 // pred_fallthru
      _
    // Predicated region
    $region38: #{tpu_custom_call.1} parent=1 // pred_check
      _
    $region39: #{tpu_custom_call.1} parent=1 // pred_check_branch
      %92 = sbr.rel (0) target = $region41
    $region40: #{tpu_custom_call.1} parent=1 // pred_region
      %94 = dma.done [#allocation9], 128
    $region41: #{tpu_custom_call.1} parent=1 // pred_fallthru
      _
    %v96 = vld [vmem:[#allocation10] sm:$0xff]
    %v97 = vld [vmem:[#allocation2] sm:$0xff]
    %v98 = vpack.c.bf16 %v97, %v97
    %v99 = vld [vmem:[#allocation5] sm:$0xf]
    %v100 = vld [vmem:[#allocation5 + $0x4] sm:$0xf]
    %v101 = vld [vmem:[#allocation5 + $0x8] sm:$0xf]
    %v102 = vld [vmem:[#allocation5 + $0xc] sm:$0xf]
    %v103 = vperm.slane %v96, 0
    %v108 = vunpack.c.l.b16 %v99
    %v109 = vunpack.c.l.b16 %v100
    %v110 = vunpack.c.l.b16 %v101
    %v111 = vunpack.c.l.b16 %v102
    %v112 = vpack.c.b16 %v109, %v108
    %v113 = vpack.c.b16 %v111, %v110
    %vm116 = vcmask 261120
    %v118 = vsel %vm116, %v98, 0
    %120 = vmatpush.bf16.msra.mxu0 0
    %121 = vmatpush.bf16.msra.mxu0 0
    %122 = vmatpush.bf16.msra.mxu0 0
    %123 = vmatpush.bf16.msra.mxu0 0
    %124 = vmatpush.bf16.msra.mxu0 0
    %125 = vmatpush.bf16.msra.mxu0 0
    %126 = vmatpush.bf16.msra.mxu0 %v113
    %127 = vmatpush.bf16.msra.mxu0 %v112
    %128 = vmatmul.bf16.gmra.mxu0 %v118
    %v129 = vpop.f32.mrf.mxu0
    %v130 = vadd.f32 %v103, %v129
    %v131 = vpop.f32.mrf.mxu0
    %132 = vdwg.mxu0
    %133 = vadd.xlane.f32.xlu0 %v130
    %v134 = vpop.xlane.xlu0 %133
    %v135 = vmul.f32 %v134, 0.015625
    %v136 = vsub.f32 %v130, %v135
    %v137 = vperm.slane %v96, 7
    %v138 = vmul.f32 %v136, %v137
    %v139 = vmul.f32 %v138, %v138
    %140 = vadd.xlane.f32.xlu0 %v139
    %v141 = vpop.xlane.xlu0 %140
    %v142 = vmul.f32 %v141, 0.015625
    %v143 = vadd.f32 %v142, 1e-05
    %v144 = vrsqrt.pop %v143
    %v145 = vmul.f32 %v144, %v143
    %v146 = vmul.f32 %v145, %v144
    %v147 = vmul.f32 0.5, %v146
    %v148 = vsub.f32 1.5, %v147
    %v149 = vmul.f32 %v144, %v148
    %vm150 = vweird.f32 %v143
    %vm151 = vweird.f32 %v144
    %vm152 = vmor %vm150, %vm151
    %v153 = vsel %vm152, %v144, %v149
    %v154 = vmul.f32 %v138, %v153
    %v155 = vperm.slane %v96, 1
    %v156 = vmul.f32 %v154, %v155
    %v157 = vperm.slane %v96, 2
    %v158 = vadd.f32 %v156, %v157
    %v159 = vpack.c.bf16 %v158, %v158
    %v160 = vld [vmem:[#allocation7] sm:$0xf]
    %v161 = vld [vmem:[#allocation7 + $0x4] sm:$0xf]
    %v162 = vld [vmem:[#allocation7 + $0x8] sm:$0xf]
    %v163 = vld [vmem:[#allocation7 + $0xc] sm:$0xf]
    %v164 = vld [vmem:[#allocation7 + $0x10] sm:$0xf]
    %v165 = vld [vmem:[#allocation7 + $0x14] sm:$0xf]
    %v166 = vld [vmem:[#allocation7 + $0x18] sm:$0xf]
    %v167 = vld [vmem:[#allocation7 + $0x1c] sm:$0xf]
    %v168 = vld [vmem:[#allocation7 + $0x20] sm:$0xf]
    %v169 = vld [vmem:[#allocation7 + $0x24] sm:$0xf]
    %v170 = vld [vmem:[#allocation7 + $0x28] sm:$0xf]
    %v171 = vld [vmem:[#allocation7 + $0x2c] sm:$0xf]
    %v172 = vld [vmem:[#allocation7 + $0x30] sm:$0xf]
    %v173 = vld [vmem:[#allocation7 + $0x34] sm:$0xf]
    %v174 = vld [vmem:[#allocation7 + $0x38] sm:$0xf]
    %v175 = vld [vmem:[#allocation7 + $0x3c] sm:$0xf]
    %v176 = vperm.slane %v96, 3
    %v193 = vunpack.c.l.b16 %v160
    %v194 = vunpack.c.l.b16 %v161
    %v195 = vunpack.c.l.b16 %v162
    %v196 = vunpack.c.l.b16 %v163
    %v197 = vunpack.c.l.b16 %v164
    %v198 = vunpack.c.l.b16 %v165
    %v199 = vunpack.c.l.b16 %v166
    %v200 = vunpack.c.l.b16 %v167
    %v201 = vunpack.c.l.b16 %v168
    %v202 = vunpack.c.l.b16 %v169
    %v203 = vunpack.c.l.b16 %v170
    %v204 = vunpack.c.l.b16 %v171
    %v205 = vunpack.c.l.b16 %v172
    %v206 = vunpack.c.l.b16 %v173
    %v207 = vunpack.c.l.b16 %v174
    %v208 = vunpack.c.l.b16 %v175
    %v209 = vpack.c.b16 %v194, %v193
    %v210 = vpack.c.b16 %v196, %v195
    %v211 = vpack.c.b16 %v198, %v197
    %v212 = vpack.c.b16 %v200, %v199
    %v213 = vpack.c.b16 %v202, %v201
    %v214 = vpack.c.b16 %v204, %v203
    %v215 = vpack.c.b16 %v206, %v205
    %v216 = vpack.c.b16 %v208, %v207
    %225 = vmatpush.bf16.msra.mxu0 %v216
    %226 = vmatpush.bf16.msra.mxu0 %v215
    %227 = vmatpush.bf16.msra.mxu0 %v214
    %228 = vmatpush.bf16.msra.mxu0 %v213
    %229 = vmatpush.bf16.msra.mxu0 %v212
    %230 = vmatpush.bf16.msra.mxu0 %v211
    %231 = vmatpush.bf16.msra.mxu0 %v210
    %232 = vmatpush.bf16.msra.mxu0 %v209
    %233 = vmatmul.bf16.gmra.mxu0 %v159
    %v234 = vpop.f32.mrf.mxu0
    %v235 = vadd.f32 %v176, %v234
    %v236 = vpop.f32.mrf.mxu0
    %237 = vdwg.mxu0
    %v238 = vmax.f32 %v235, 0.0
    %v239 = vpack.c.bf16 %v238, %v238
    %v240 = vld [vmem:[#allocation8] sm:$0xf]
    %v241 = vld [vmem:[#allocation8 + $0x4] sm:$0xf]
    %v242 = vld [vmem:[#allocation8 + $0x8] sm:$0xf]
    %v243 = vld [vmem:[#allocation8 + $0xc] sm:$0xf]
    %v244 = vld [vmem:[#allocation8 + $0x10] sm:$0xf]
    %v245 = vld [vmem:[#allocation8 + $0x14] sm:$0xf]
    %v246 = vld [vmem:[#allocation8 + $0x18] sm:$0xf]
    %v247 = vld [vmem:[#allocation8 + $0x1c] sm:$0xf]
    %v248 = vld [vmem:[#allocation8 + $0x20] sm:$0xf]
    %v249 = vld [vmem:[#allocation8 + $0x24] sm:$0xf]
    %v250 = vld [vmem:[#allocation8 + $0x28] sm:$0xf]
    %v251 = vld [vmem:[#allocation8 + $0x2c] sm:$0xf]
    %v252 = vld [vmem:[#allocation8 + $0x30] sm:$0xf]
    %v253 = vld [vmem:[#allocation8 + $0x34] sm:$0xf]
    %v254 = vld [vmem:[#allocation8 + $0x38] sm:$0xf]
    %v255 = vld [vmem:[#allocation8 + $0x3c] sm:$0xf]
    %v256 = vperm.slane %v96, 4
    %v273 = vunpack.c.l.b16 %v240
    %v274 = vunpack.c.l.b16 %v241
    %v275 = vunpack.c.l.b16 %v242
    %v276 = vunpack.c.l.b16 %v243
    %v277 = vunpack.c.l.b16 %v244
    %v278 = vunpack.c.l.b16 %v245
    %v279 = vunpack.c.l.b16 %v246
    %v280 = vunpack.c.l.b16 %v247
    %v281 = vunpack.c.l.b16 %v248
    %v282 = vunpack.c.l.b16 %v249
    %v283 = vunpack.c.l.b16 %v250
    %v284 = vunpack.c.l.b16 %v251
    %v285 = vunpack.c.l.b16 %v252
    %v286 = vunpack.c.l.b16 %v253
    %v287 = vunpack.c.l.b16 %v254
    %v288 = vunpack.c.l.b16 %v255
    %v289 = vpack.c.b16 %v274, %v273
    %v290 = vpack.c.b16 %v276, %v275
    %v291 = vpack.c.b16 %v278, %v277
    %v292 = vpack.c.b16 %v280, %v279
    %v293 = vpack.c.b16 %v282, %v281
    %v294 = vpack.c.b16 %v284, %v283
    %v295 = vpack.c.b16 %v286, %v285
    %v296 = vpack.c.b16 %v288, %v287
    %305 = vmatpush.bf16.msra.mxu0 %v296
    %306 = vmatpush.bf16.msra.mxu0 %v295
    %307 = vmatpush.bf16.msra.mxu0 %v294
    %308 = vmatpush.bf16.msra.mxu0 %v293
    %309 = vmatpush.bf16.msra.mxu0 %v292
    %310 = vmatpush.bf16.msra.mxu0 %v291
    %311 = vmatpush.bf16.msra.mxu0 %v290
    %312 = vmatpush.bf16.msra.mxu0 %v289
    %313 = vmatmul.bf16.gmra.mxu0 %v239
    %v314 = vpop.f32.mrf.mxu0
    %v315 = vadd.f32 %v256, %v314
    %v316 = vpop.f32.mrf.mxu0
    %317 = vdwg.mxu0
    %318 = vadd.xlane.f32.xlu0 %v315
    %v319 = vpop.xlane.xlu0 %318
    %v320 = vmul.f32 %v319, 0.015625
    %v321 = vsub.f32 %v315, %v320
    %v322 = vmul.f32 %v321, %v137
    %v323 = vmul.f32 %v322, %v322
    %324 = vadd.xlane.f32.xlu0 %v323
    %v325 = vpop.xlane.xlu0 %324
    %v326 = vmul.f32 %v325, 0.015625
    %v327 = vadd.f32 %v326, 1e-05
    %v328 = vrsqrt.pop %v327
    %v329 = vmul.f32 %v328, %v327
    %v330 = vmul.f32 %v329, %v328
    %v331 = vmul.f32 0.5, %v330
    %v332 = vsub.f32 1.5, %v331
    %v333 = vmul.f32 %v328, %v332
    %vm334 = vweird.f32 %v327
    %vm335 = vweird.f32 %v328
    %vm336 = vmor %vm334, %vm335
    %v337 = vsel %vm336, %v328, %v333
    %v338 = vmul.f32 %v322, %v337
    %v339 = vperm.slane %v96, 5
    %v340 = vmul.f32 %v338, %v339
    %v341 = vperm.slane %v96, 6
    %v342 = vadd.f32 %v340, %v341
    %vm343 = vcmask 523264
    %344 = vst.msk [vmem:[#allocation11] sm:$0xff] %vm343, %v342
    // Predicated region
    $region42: #{tpu_custom_call.1} parent=1 // pred_check
      _
    $region43: #{tpu_custom_call.1} parent=1 // pred_check_branch
      %346 = sbr.rel (0) target = $region45
    $region44: #{tpu_custom_call.1} parent=1 // pred_region
      %348 = vsyncadd [#allocation4], 0
      %s350 = sshll.u32 [#allocation11], 4
      %s351 = int_to_ptr.vmem [resolvable:$true] %s350
      %s352 = sshll.u32 %s5, 4
      %s353 = int_to_ptr.hbm [resolvable:$true] %s352
      %355 = dma.vmem_to_hbm [thread:$0]  %s351, 128, %s353, [#allocation4]
    $region45: #{tpu_custom_call.1} parent=1 // pred_fallthru
      _
    // Predicated region
    $region46: #{tpu_custom_call.1} parent=1 // pred_check
      _
    $region47: #{tpu_custom_call.1} parent=1 // pred_check_branch
      %357 = sbr.rel (0) target = $region49
    $region48: #{tpu_custom_call.1} parent=1 // pred_region
      %359 = dma.done [#allocation4], 128
    $region49: #{tpu_custom_call.1} parent=1 // pred_fallthru
      _
    %360 = vsyncpa [#allocation3], 1
    %361 = vsyncpa [#allocation6], 1
    %362 = vsyncpa [#allocation9], 1
    %363 = vsyncpa [#allocation4], 1

</llo_original>
